<compile_context>
chip_gen: v7x
topology: tpu7x:2x2x1
jax: 0.10.0
libtpu: 0.0.40
codegen_flags: <defaults>
</compile_context>

<pallas_src>
import functools

import jax
import jax.numpy as jnp
import numpy as np
from jax.experimental import pallas as pl
from jax.experimental.pallas import tpu as pltpu

# ----------------------- small synthetic configuration -----------------------
N_PROMPTS = 2                      # batch of learned prompts (n_classes in CoOp)
N_CTX     = 3                      # n_words: learnable context tokens per prompt
CTX_DIM   = 128                    # transformer width (one full vreg lane row)
CTX_LEN   = 8                      # tokenized context length L
VOCAB     = 64                     # synthetic token-embedding vocabulary


# --------------------------------- kernel ------------------------------------
def prompt_scatter_kernel(ctx_ref, base_ref, out_ref, copy_sem, *, tb, n_ctx):
    """Scatter the learnable ctx rows into the aliased prompts buffer.

    base_ref is the same HBM buffer as out_ref (input_output_aliases) and
    already holds the constant prefix/suffix rows baked in at init time, so the
    only bytes this kernel moves are the ctx rows: one VMEM->HBM DMA per prompt
    block.  No full-tile writeback of the constant rows ever happens.
    """
    del base_ref  # identical buffer to out_ref; nothing to read.
    i = pl.program_id(0)
    row0 = pl.multiple_of(i * tb, tb)
    cp = pltpu.make_async_copy(
        ctx_ref,                                             # (tb, n_ctx, D) VMEM block
        out_ref.at[pl.ds(row0, tb), pl.ds(1, n_ctx), :],     # rows [1, 1+n_ctx) in HBM
        copy_sem,
    )
    cp.start()
    cp.wait()


# -------------------------------- wrapper ------------------------------------
def _pick_prompt_block(n_prompts, target):
    tb = max(1, min(target, n_prompts))
    while n_prompts % tb:
        tb -= 1
    return tb


def prompt_learner_forward(ctx, base_prompts, *, block_prompts=512):
    """prompts = concat([prefix, ctx, suffix], 1), with prefix/suffix pre-baked
    into `base_prompts` (the init-time token embedding of the tokenized prompt)."""
    b, n_ctx, d = ctx.shape
    bb, seq, dd = base_prompts.shape
    assert bb == b and dd == d and 1 + n_ctx <= seq
    # Match the PyTorch module: ctx and the token embeddings share clip_model.dtype.
    assert ctx.dtype == base_prompts.dtype, "ctx / embedding dtype mismatch"

    tb = _pick_prompt_block(b, block_prompts)   # block only over prompts; D, n_ctx stay whole
    grid = (b // tb,)

    kernel = functools.partial(prompt_scatter_kernel, tb=tb, n_ctx=n_ctx)
    return pl.pallas_call(
        kernel,
        out_shape=jax.ShapeDtypeStruct((b, seq, d), base_prompts.dtype),
        grid_spec=pltpu.PrefetchScalarGridSpec(
            num_scalar_prefetch=0,
            grid=grid,
            in_specs=[
                # learnable ctx: auto-pipelined into VMEM, one prompt block per step
                pl.BlockSpec((tb, n_ctx, d), lambda i: (i, 0, 0)),
                # baked prompts buffer: stays in HBM, no auto-DMA
                pl.BlockSpec(memory_space=pl.ANY),
            ],
            # output aliased to base_prompts; written only via the manual DMA
            out_specs=pl.BlockSpec(memory_space=pl.ANY),
            scratch_shapes=[pltpu.SemaphoreType.DMA(())],
        ),
        input_output_aliases={1: 0},            # base_prompts  <->  prompts output
        compiler_params=pltpu.CompilerParams(
            dimension_semantics=("parallel",),  # shards prompt blocks across v7x's 2 TCs
            has_side_effects=True,              # in-place update of the aliased buffer
        ),
    )(ctx, base_prompts)


# --------------------------------- main --------------------------------------
if __name__ == "__main__":
    key = jax.random.PRNGKey(0)
    k_ctx, k_emb = jax.random.split(key)

    # Learnable context vectors, init ~ N(0, 0.02) as in the PyTorch module.
    ctx = 0.02 * jax.random.normal(k_ctx, (N_PROMPTS, N_CTX, CTX_DIM), jnp.float32)

    # ---- init-time, host-side (NOT part of forward) --------------------------
    # Synthetic clip_model.token_embedding(clip.tokenize("X X X.")):
    # [SOS, X, X, X, '.', EOS, pad, pad] per prompt.
    token_table = 0.1 * jax.random.normal(k_emb, (VOCAB, CTX_DIM), jnp.float32)
    tokenized_prompts = jnp.array(
        [[1, 10, 10, 10, 11, 2, 0, 0],
         [1, 10, 10, 10, 11, 2, 0, 0]], dtype=jnp.int32)
    embedding = token_table[tokenized_prompts]            # (B, L, D)

    token_prefix = embedding[:, :1, :]                    # register_buffer token_prefix
    token_suffix = embedding[:, 1 + N_CTX:, :]            # register_buffer token_suffix
    base_prompts = embedding                               # prefix/suffix baked in; ctx rows are
                                                           # placeholder 'X' embeddings, overwritten.

    # Plain-JAX reference of the forward pass (computed before the kernel call).
    ref = jnp.concatenate([token_prefix, ctx, token_suffix], axis=1)

    out = jax.block_until_ready(prompt_learner_forward(ctx, base_prompts))

    np.testing.assert_allclose(np.asarray(out), np.asarray(ref), rtol=0.0, atol=0.0)
    assert out.shape == (N_PROMPTS, CTX_LEN, CTX_DIM) and out.dtype == jnp.float32
    print("KERNEL_OK")
</pallas_src>

<mosaic_0001>
module attributes {stable_mosaic.version = 11 : i64} {
  func.func @prompt_scatter_kernel(%arg0: i32, %arg1: memref<2x3x128xf32, #tpu.memory_space<vmem>>, %arg2: memref<2x8x128xf32, #tpu.memory_space<any>>, %arg3: memref<2x8x128xf32, #tpu.memory_space<any>>, %arg4: memref<!tpu.dma_semaphore, #tpu.memory_space<semaphore_mem>>) attributes {dimension_semantics = [#tpu.dimension_semantics<parallel>], iteration_bounds = array<i64: 1>, scalar_prefetch = 0 : i64, scratch_operands = 1 : i64, tpu.core_type = #tpu.core_type<tc>, window_params = [{transform_indices = @transform_0, window_bounds = array<i64: 2, 3, 128>}, {}, {}]} {
    %c2_i32 = arith.constant 2 : i32
    %0 = arith.muli %arg0, %c2_i32 : i32
    %1 = tpu.assume_multiple %0, 2 : i32
    %c1_i32 = arith.constant 1 : i32
    %c0_i32 = arith.constant 0 : i32
    %2 = tpu.memref_slice %arg3[%1, %c1_i32, %c0_i32] : memref<2x8x128xf32, #tpu.memory_space<any>> -> memref<2x3x128xf32, #tpu.memory_space<any>>
    tpu.enqueue_dma source(%arg1 : memref<2x3x128xf32, #tpu.memory_space<vmem>>) target(%2 : memref<2x3x128xf32, #tpu.memory_space<any>>) target_semaphore(%arg4 : memref<!tpu.dma_semaphore, #tpu.memory_space<semaphore_mem>>)
    %c1_i32_0 = arith.constant 1 : i32
    %c0_i32_1 = arith.constant 0 : i32
    %3 = tpu.memref_slice %arg3[%1, %c1_i32_0, %c0_i32_1] : memref<2x8x128xf32, #tpu.memory_space<any>> -> memref<2x3x128xf32, #tpu.memory_space<any>>
    tpu.wait_dma2 semaphore(%arg4 : memref<!tpu.dma_semaphore, #tpu.memory_space<semaphore_mem>>) src(%arg1 : memref<2x3x128xf32, #tpu.memory_space<vmem>>) dst(%3 : memref<2x3x128xf32, #tpu.memory_space<any>>)
    return
  }
  func.func @transform_0(%arg0: i32) -> (i32, i32, i32) {
    %c0_i32 = arith.constant 0 : i32
    %c0_i32_0 = arith.constant 0 : i32
    %c0_i32_1 = arith.constant 0 : i32
    return %arg0, %c0_i32, %c0_i32_0 : i32, i32, i32
  }
}

</mosaic_0001>

<llo_original>
// kernel: tpu_custom_call.1
$region0: #{tpu_custom_call.1}
  #allocation0 [shape = 'u32[]', space=smem, size = 0x4, offset = 0x4, fixed_abs, tag = 'smem constant byte address 0x4 - core index']
  #allocation1 [shape = 'u32[144,128]{1,0:T(1,128)}', space=vmem, size = 0x12000, scoped, tag = 'internal scratch']
  #allocation2 [shape = 's32[1]{0}', space=sflag, size = 0x4, scoped, tag = 'scratch operand']
  #allocation3 [shape = 's32[]', space=sflag, size = 0x4, offset = 0, fixed_abs, tag = 'sflag constant byte address 0x0 - dummy sync flag']
  %s0 = inlined_call_operand.vmem [shape: f32[2,3,128], index: 0, kind: input, shape index: {}]
  %s1 = inlined_call_operand.hbm [shape: f32[2,8,128], index: 1, kind: input, shape index: {}, may-alias: {1,2}]
  %s2 = inlined_call_operand.hbm [shape: f32[2,8,128], index: 2, kind: output, shape index: {}, may-alias: {1,2}]
  %s3 = sld [smem:[#allocation0]]
  $region6: #{tpu_custom_call.1} parent=0
    _
  %s5 = ssub.s32 1, %s3
  %s6 = scalar_select 0, %s5, %s3
  // Predicated region
  $region2: #{tpu_custom_call.1} parent=0 // pred_check
    _
  $region3: #{tpu_custom_call.1} parent=0 // pred_check_branch
    %8 = sbr.rel (0) target = $region5
  $region4: #{tpu_custom_call.1} parent=0 // pred_region
    _
  $region5: #{tpu_custom_call.1} parent=0 // pred_fallthru
    _
  %s9 = smul.u32 0, 2
  %s10 = smul.u32 %s9, 8
  %s11 = sadd.s32 1, %s10
  %s12 = smul.addr %s11, 16
  %s13 = scalar_lea.hbm %s2, %s12
  %s15 = sshll.u32 %s0, 4
  %s16 = int_to_ptr.vmem [resolvable:$true] %s15
  %18 = dma.vmem_to_hbm [thread:$0]  %s16, 96, %s13, [#allocation2], 64, 128, 3
  %s19 = smul.u32 2, 3
  %s20 = smul.u32 %s19, 1
  %s21 = sshll.u32 %s20, 4
  %22 = dma.done [#allocation2], %s21
  %23 = vsyncmov [#allocation2]
  %s24 = vpop.sfrf %23
  %p25 = scmp.eq.s32.totalorder %s24, 0
  %p26 = pneg %p25
  %28 = shalt.err (%p26)

</llo_original>
